<compile_context>
chip_gen: v5e
topology: v5e:2x2
jax: 0.10.0
libtpu: 0.0.40
codegen_flags: <defaults>
</compile_context>

<pallas_src>
import jax
import jax.numpy as jnp
from jax.experimental import pallas as pl
from jax.experimental.pallas import tpu as pltpu


# ---------------------------------------------------------------------------
# Parameter setup (buffer `pe` from __init__) — plain JAX glue, deterministic.
# ---------------------------------------------------------------------------
def build_pe(dim, h_max, w_max, dtype=jnp.float32):
    """Reproduces the PyTorch __init__ construction of self.pe exactly."""
    assert dim % 4 == 0, "PositionalEncoding2D (like the PyTorch original) needs dim % 4 == 0"
    pe = jnp.zeros((1, dim, h_max, w_max), dtype)
    div = jnp.exp(-jnp.arange(0.0, dim // 2, 2.0) / dim
                  * jnp.log(jnp.float32(10000.0)))[:, None]        # (dim//4, 1)
    w_pos = jnp.arange(0.0, w_max, dtype=jnp.float32)
    h_pos = jnp.arange(0.0, h_max, dtype=jnp.float32)
    sin_h = jnp.sin(h_pos * div)   # (dim//4, h_max)
    cos_h = jnp.cos(h_pos * div)
    sin_w = jnp.sin(w_pos * div)   # (dim//4, w_max)
    cos_w = jnp.cos(w_pos * div)
    full = (1, dim // 4, h_max, w_max)
    pe = pe.at[:, 0:dim // 2:2, :, :].set(
        jnp.broadcast_to(sin_h[None, :, :, None], full).astype(dtype))
    pe = pe.at[:, 1:dim // 2:2, :, :].set(
        jnp.broadcast_to(cos_h[None, :, :, None], full).astype(dtype))
    pe = pe.at[:, dim // 2::2, :, :].set(
        jnp.broadcast_to(sin_w[None, :, None, :], full).astype(dtype))
    pe = pe.at[:, dim // 2 + 1::2, :, :].set(
        jnp.broadcast_to(cos_w[None, :, None, :], full).astype(dtype))
    return pe


def prepare_pe(pe, H, W, dtype):
    """One-time slice + cast of the PE buffer for a given input size / dtype.

    When W < w_max the slice is non-contiguous, so XLA materializes a (C, H, W)
    copy; doing it once here (cached by the caller) instead of inside the
    forward removes a full extra HBM pass from every call.
    """
    return jnp.asarray(pe[0, :, :H, :W], dtype)   # (C, H, W)


# ---------------------------------------------------------------------------
# Pallas kernels: elementwise broadcast-add of pe onto x (the forward hot path).
# ---------------------------------------------------------------------------
def _add_pe_chw_kernel(x_ref, pe_ref, o_ref):
    # x_ref / o_ref : (tc, thw) tile of one batch element (batch dim squeezed).
    # pe_ref        : matching (tc, thw) PE tile; the grid is ordered (c, hw, b)
    #                 so its block index is constant over the innermost batch
    #                 axis and it is only re-DMA'd when the (c, hw) tile changes.
    o_ref[...] = x_ref[...] + pe_ref[...]


def _add_pe_flat_kernel(x_ref, pe_ref, o_ref):
    # x_ref / o_ref : (B, tn) lane-dense tile covering all batch elements.
    # pe_ref        : (1, tn) PE tile, broadcast over the batch inside the VPU.
    o_ref[...] = x_ref[...] + pe_ref[...]


# ---------------------------------------------------------------------------
# Tiling helpers.
# ---------------------------------------------------------------------------
def _sublane_multiple(dtype):
    # Sub-32-bit dtypes pack along sublanes: 16 rows for bf16, 32 for int8/fp8.
    return max(8, 32 // jnp.dtype(dtype).itemsize)


def _divisors(n):
    ds, i = set(), 1
    while i * i <= n:
        if n % i == 0:
            ds.add(i)
            ds.add(n // i)
        i += 1
    return sorted(ds)


def _pick_tile(total, multiple, max_elems):
    """Largest divisor of `total` that is a multiple of `multiple` (or equals
    `total`) and fits in `max_elems`; falls back to the smallest legal tile."""
    legal = [d for d in _divisors(total) if d % multiple == 0 or d == total]
    fitting = [d for d in legal if d <= max_elems]
    return max(fitting) if fitting else min(legal)


def _compiler_params(dimension_semantics, vmem_bytes):
    kwargs = dict(dimension_semantics=dimension_semantics)
    # Only raise the scoped-VMEM limit when a (rare) fallback tile needs it;
    # cap below v7x's 64 MiB physical VMEM.
    if vmem_bytes > 12 * 1024 * 1024:
        kwargs["vmem_limit_bytes"] = min(int(vmem_bytes * 5 // 4), 60 * 1024 * 1024)
    return pltpu.CompilerParams(**kwargs)


# ---------------------------------------------------------------------------
# Forward wrapper.
# ---------------------------------------------------------------------------
def positional_encoding_2d_forward(x, pe_sliced, *, target_tile_bytes=2 << 20):
    """x: (B, C, H, W); pe_sliced: (C, H, W) from prepare_pe. Returns x + pe."""
    B, C, H, W = x.shape
    assert pe_sliced.shape == (C, H, W), (pe_sliced.shape, (C, H, W))
    pe_sliced = pe_sliced.astype(x.dtype)   # no-op when prepare_pe already cast
    HW = H * W
    itemsize = jnp.dtype(x.dtype).itemsize
    sub_mult = _sublane_multiple(x.dtype)
    max_elems = max(1, target_tile_bytes // itemsize)

    cost = pl.CostEstimate(
        flops=B * C * HW,
        transcendentals=0,
        bytes_accessed=(2 * B * C * HW + C * HW) * itemsize,
    )

    if HW % 128 == 0:
        # Layout A: (B, C, HW), channel x HW tiles, PE resident across the batch.
        x3 = x.reshape(B, C, HW)            # contiguous collapse -> free
        pe2 = pe_sliced.reshape(C, HW)
        thw = _pick_tile(HW, 128, max_elems)
        tc = _pick_tile(C, sub_mult, max(1, max_elems // thw))
        n_c, n_hw = C // tc, HW // thw
        # v7x megacore: make sure there are >= 2 grid steps to split across TCs.
        if n_c * n_hw * B < 2:
            smaller = [d for d in _divisors(C) if d % sub_mult == 0 and d < tc]
            if smaller:
                tc = max(smaller)
                n_c = C // tc
        vmem_bytes = 6 * tc * thw * itemsize   # x, out, pe each double-buffered
        out = pl.pallas_call(
            _add_pe_chw_kernel,
            out_shape=jax.ShapeDtypeStruct((B, C, HW), x.dtype),
            grid_spec=pl.GridSpec(
                grid=(n_c, n_hw, B),           # batch innermost: PE tile stays resident
                in_specs=[
                    pl.BlockSpec((pl.Squeezed(), tc, thw), lambda c, h, b: (b, c, h)),
                    pl.BlockSpec((tc, thw), lambda c, h, b: (c, h)),
                ],
                out_specs=pl.BlockSpec((pl.Squeezed(), tc, thw), lambda c, h, b: (b, c, h)),
            ),
            compiler_params=_compiler_params(("parallel", "parallel", "parallel"), vmem_bytes),
            cost_estimate=cost,
        )(x3, pe2)
        return out.reshape(B, C, H, W)

    # Layout B: tiny / odd H*W -> collapse C into the lane dim so every
    # load/store is still >= 128 lanes wide (avoids masked partial vst/vld).
    N = C * HW
    x2 = x.reshape(B, N)
    pe2 = pe_sliced.reshape(1, N)
    # VMEM per step: 2x (B,tn) x + 2x (B,tn) out + 2x (1,tn) pe (padded to 8 sublanes).
    per_elem = (4 * B + 16) * itemsize
    tn = _pick_tile(N, 128, max(1, (6 * target_tile_bytes) // per_elem))
    n_t = N // tn
    if n_t < 2:  # give the v7x megacore >= 2 steps when possible
        smaller = [d for d in _divisors(N) if d % 128 == 0 and d < tn]
        if smaller:
            tn = max(smaller)
            n_t = N // tn
    vmem_bytes = per_elem * tn
    out = pl.pallas_call(
        _add_pe_flat_kernel,
        out_shape=jax.ShapeDtypeStruct((B, N), x.dtype),
        grid_spec=pl.GridSpec(
            grid=(n_t,),
            in_specs=[
                pl.BlockSpec((B, tn), lambda t: (0, t)),
                pl.BlockSpec((1, tn), lambda t: (0, t)),
            ],
            out_specs=pl.BlockSpec((B, tn), lambda t: (0, t)),
        ),
        compiler_params=_compiler_params(("parallel",), vmem_bytes),
        cost_estimate=cost,
    )(x2, pe2)
    return out.reshape(B, C, H, W)


# ---------------------------------------------------------------------------
# Module-like wrapper: builds pe once, caches the sliced/cast copy per (H, W, dtype).
# ---------------------------------------------------------------------------
class PositionalEncoding2D:
    def __init__(self, dim, h_max, w_max, dtype=jnp.float32):
        self.dim, self.h_max, self.w_max = dim, h_max, w_max
        self.pe = build_pe(dim, h_max, w_max, dtype)
        self._pe_cache = {}
        self._fwd = jax.jit(positional_encoding_2d_forward)

    def _pe_for(self, H, W, dtype):
        key = (H, W, jnp.dtype(dtype).name)
        if key not in self._pe_cache:
            self._pe_cache[key] = prepare_pe(self.pe, H, W, dtype)
        return self._pe_cache[key]

    def __call__(self, x):
        _, C, H, W = x.shape
        assert C == self.dim and H <= self.h_max and W <= self.w_max
        return self._fwd(x, self._pe_for(H, W, x.dtype))

    def get_pe_by_size(self, h, w):
        return self.pe[:, :, :h, :w]


if __name__ == "__main__":
    # Small deterministic example consistent with the module:
    # dim (=C) = 8, h_max = w_max = 32 (> H, W to exercise the forward slice), batch = 2.
    B, C, H, W = 2, 8, 16, 16
    h_max, w_max = 32, 32

    key = jax.random.PRNGKey(0)
    x = jax.random.normal(key, (B, C, H, W), dtype=jnp.float32)

    module = PositionalEncoding2D(C, h_max, w_max)
    out = jax.block_until_ready(module(x))

    # Correctness check against a plain-JAX reference of the PyTorch forward.
    ref = x + module.pe[:, :, :H, :W]
    assert out.shape == (B, C, H, W)
    assert jnp.allclose(out, ref, atol=1e-6, rtol=1e-6)

    print("KERNEL_OK")
</pallas_src>

<mosaic_0001>
module attributes {stable_mosaic.version = 11 : i64} {
  func.func @_add_pe_chw_kernel(%arg0: i32, %arg1: i32, %arg2: i32, %arg3: memref<1x8x256xf32, #tpu.memory_space<vmem>>, %arg4: memref<8x256xf32, #tpu.memory_space<vmem>>, %arg5: memref<1x8x256xf32, #tpu.memory_space<vmem>>) attributes {dimension_semantics = [#tpu.dimension_semantics<parallel>, #tpu.dimension_semantics<parallel>, #tpu.dimension_semantics<parallel>], iteration_bounds = array<i64: 1, 1, 2>, scalar_prefetch = 0 : i64, scratch_operands = 0 : i64, tpu.core_type = #tpu.core_type<tc>, window_params = [{transform_indices = @transform_0, window_bounds = array<i64: 1, 8, 256>}, {transform_indices = @transform_1, window_bounds = array<i64: 8, 256>}, {transform_indices = @transform_2, window_bounds = array<i64: 1, 8, 256>}]} {
    %c0 = arith.constant 0 : index
    %c0_0 = arith.constant 0 : index
    %c0_1 = arith.constant 0 : index
    %0 = vector.load %arg3[%c0, %c0_0, %c0_1] : memref<1x8x256xf32, #tpu.memory_space<vmem>>, vector<1x8x256xf32>
    %1 = vector.shape_cast %0 : vector<1x8x256xf32> to vector<8x256xf32>
    %c0_2 = arith.constant 0 : index
    %c0_3 = arith.constant 0 : index
    %2 = vector.load %arg4[%c0_2, %c0_3] : memref<8x256xf32, #tpu.memory_space<vmem>>, vector<8x256xf32>
    %3 = arith.addf %1, %2 : vector<8x256xf32>
    %c0_4 = arith.constant 0 : index
    %c0_5 = arith.constant 0 : index
    %c0_6 = arith.constant 0 : index
    %4 = vector.load %arg5[%c0_4, %c0_5, %c0_6] : memref<1x8x256xf32, #tpu.memory_space<vmem>>, vector<1x8x256xf32>
    %5 = vector.shape_cast %4 : vector<1x8x256xf32> to vector<8x256xf32>
    %6 = vector.shape_cast %3 : vector<8x256xf32> to vector<1x8x256xf32>
    tpu.vector_store %arg5[%c0_4, %c0_5, %c0_6], %6 {strides = array<i32>} : memref<1x8x256xf32, #tpu.memory_space<vmem>>, vector<1x8x256xf32>,
    return
  }
  func.func @transform_0(%arg0: i32, %arg1: i32, %arg2: i32) -> (i32, i32, i32) {
    %c0_i32 = arith.constant 0 : i32
    return %arg2, %arg0, %arg1 : i32, i32, i32
  }
  func.func @transform_1(%arg0: i32, %arg1: i32, %arg2: i32) -> (i32, i32) {
    %c0_i32 = arith.constant 0 : i32
    return %arg0, %arg1 : i32, i32
  }
  func.func @transform_2(%arg0: i32, %arg1: i32, %arg2: i32) -> (i32, i32, i32) {
    %c0_i32 = arith.constant 0 : i32
    return %arg2, %arg0, %arg1 : i32, i32, i32
  }
}

</mosaic_0001>

<llo_original>
// kernel: positional_encoding_2d_forward.1
$region0: #{positional_encoding_2d_forward.1}
  #allocation0 [shape = 'u32[]', space=smem, size = 0x4, offset = 0x4, fixed_abs, tag = 'smem constant byte address 0x4 - core index']
  #allocation1 [shape = 'u32[72,128]{1,0:T(1,128)}', space=vmem, size = 0x9000, scoped, tag = 'internal scratch']
  %s0 = inlined_call_operand.vmem [shape: f32[2,8,256], index: 0, kind: input, shape index: {}]
  %s1 = inlined_call_operand.vmem [shape: f32[8,256], index: 1, kind: input, shape index: {}]
  %s2 = inlined_call_operand.vmem [shape: f32[2,8,256], index: 2, kind: output, shape index: {}]
  %s3 = sld [smem:[#allocation0]]
  $region41: #{positional_encoding_2d_forward.1} parent=0
    _
  %s5 = ssub.s32 1, %s3
  %s6 = scalar_select 0, %s5, %s3
  loop: start=0, step=1, limit=4
  $region2: #{positional_encoding_2d_forward.1} parent=0 // loop_pre_header
    _
  $region3: #{positional_encoding_2d_forward.1} parent=0 // loop_header
    %s8 = sphi 0, %s12
    %p9 = scmp.ge.s32.totalorder %s8, 4
    %s15 = sphi 0, %s34
    %s16 = sphi 0, %s30
    %s17 = sphi 0, %s26
    %s18 = sphi 0, %s15
    %s19 = sphi 0, %s16
    %s20 = sphi 0, %s17
    %s21 = sphi 0, %s18
    %s22 = sphi 0, %s19
    %s23 = sphi 0, %s20
    %s41 = sphi 0, %s43
    %s44 = sphi 0, %s41
    %s45 = sphi 0, %s44
    %s61 = sphi 0, %s45
    %s69 = sphi 0, %s71
    %s72 = sphi 0, %s69
    %s73 = sphi 0, %s72
    %s89 = sphi 0, %s73
    %s99 = sphi 0, %s101
    %s102 = sphi 0, %s99
    %s103 = sphi 0, %s102
    %s119 = sphi 0, %s103
  $region4: #{positional_encoding_2d_forward.1} parent=0 // loop_header_branch
    %11 = sbr.rel (%p9) target = $region8
  $region5: #{positional_encoding_2d_forward.1} parent=0 // loop_body
    %s13 = ssub.s32 %s8, 1
    %s14 = ssub.s32 %s8, 2
    %s24 = sadd.s32 1, %s17
    %p25 = scmp.ge.s32.totalorder %s24, 2
    %s26 = scalar_select %p25, 0, %s24
    %s27 = sadd.s32 1, %s16
    %s28 = scalar_select %p25, %s27, %s16
    %p29 = scmp.ge.s32.totalorder %s28, 1
    %s30 = scalar_select %p29, 0, %s28
    %s31 = sadd.s32 1, %s15
    %s32 = scalar_select %p29, %s31, %s15
    %p33 = scmp.ge.s32.totalorder %s32, 1
    %s34 = scalar_select %p33, 0, %s32
    %s35 = ssub.s32 %s17, %s26
    %s36 = ssub.s32 %s15, %s34
    %s37 = sor.u32 %s35, %s36
    %s38 = ssub.s32 %s16, %s30
    %s39 = sor.u32 %s37, %s38
    %p40 = scmp.eq.s32.totalorder %s39, 0
    %s42 = sadd.s32 %s41, 1
    %s43 = scalar_select %p40, %s41, %s42
    %p46 = pneg %p40
    %p47 = scmp.eq.s32.totalorder %s8, 1
    %p48 = por %p46, %p47
    %p49 = scmp.ne.s32.totalorder %s41, %s44
    %p50 = scmp.eq.s32.totalorder %s8, 0
    %p51 = por %p49, %p50
    %p52 = scmp.ne.s32.totalorder %s41, %s44
    %p53 = scmp.eq.s32.totalorder %s13, 1
    %p54 = por %p52, %p53
    %p55 = scmp.ne.s32.totalorder %s44, %s45
    %p56 = scmp.eq.s32.totalorder %s13, 0
    %p57 = por %p55, %p56
    %p58 = scmp.ne.s32.totalorder %s44, %s45
    %p59 = scmp.eq.s32.totalorder %s14, 1
    %p60 = por %p58, %p59
    %p62 = scmp.ne.s32.totalorder %s45, %s61
    %p63 = scmp.eq.s32.totalorder %s14, 0
    %p64 = por %p62, %p63
    %s65 = ssub.s32 %s15, %s34
    %s66 = ssub.s32 %s16, %s30
    %s67 = sor.u32 %s65, %s66
    %p68 = scmp.eq.s32.totalorder %s67, 0
    %s70 = sadd.s32 %s69, 1
    %s71 = scalar_select %p68, %s69, %s70
    %p74 = pneg %p68
    %p75 = scmp.eq.s32.totalorder %s8, 1
    %p76 = por %p74, %p75
    %p77 = scmp.ne.s32.totalorder %s69, %s72
    %p78 = scmp.eq.s32.totalorder %s8, 0
    %p79 = por %p77, %p78
    %p80 = scmp.ne.s32.totalorder %s69, %s72
    %p81 = scmp.eq.s32.totalorder %s13, 1
    %p82 = por %p80, %p81
    %p83 = scmp.ne.s32.totalorder %s72, %s73
    %p84 = scmp.eq.s32.totalorder %s13, 0
    %p85 = por %p83, %p84
    %p86 = scmp.ne.s32.totalorder %s72, %s73
    %p87 = scmp.eq.s32.totalorder %s14, 1
    %p88 = por %p86, %p87
    %p90 = scmp.ne.s32.totalorder %s73, %s89
    %p91 = scmp.eq.s32.totalorder %s14, 0
    %p92 = por %p90, %p91
    %s93 = ssub.s32 %s17, %s26
    %s94 = ssub.s32 %s15, %s34
    %s95 = sor.u32 %s93, %s94
    %s96 = ssub.s32 %s16, %s30
    %s97 = sor.u32 %s95, %s96
    %p98 = scmp.eq.s32.totalorder %s97, 0
    %s100 = sadd.s32 %s99, 1
    %s101 = scalar_select %p98, %s99, %s100
    %p104 = pneg %p98
    %p105 = scmp.eq.s32.totalorder %s8, 1
    %p106 = por %p104, %p105
    %p107 = scmp.ne.s32.totalorder %s99, %s102
    %p108 = scmp.eq.s32.totalorder %s8, 0
    %p109 = por %p107, %p108
    %p110 = scmp.ne.s32.totalorder %s99, %s102
    %p111 = scmp.eq.s32.totalorder %s13, 1
    %p112 = por %p110, %p111
    %p113 = scmp.ne.s32.totalorder %s102, %s103
    %p114 = scmp.eq.s32.totalorder %s13, 0
    %p115 = por %p113, %p114
    %p116 = scmp.ne.s32.totalorder %s102, %s103
    %p117 = scmp.eq.s32.totalorder %s14, 1
    %p118 = por %p116, %p117
    %p120 = scmp.ne.s32.totalorder %s103, %s119
    %p121 = scmp.eq.s32.totalorder %s14, 0
    %p122 = por %p120, %p121
    %p123 = scmp.le.s32.totalorder 1, %s8
    %p124 = scmp.lt.s32.totalorder %s8, 3
    %p125 = pnand %p123, %p124
    %p126 = pneg %p125
    // Predicated region
    $region9: #{positional_encoding_2d_forward.1} parent=5 // pred_check
      _
    $region10: #{positional_encoding_2d_forward.1} parent=5 // pred_check_branch
      %128 = sbr.rel (%p125) target = $region12
    $region11: #{positional_encoding_2d_forward.1} parent=5 // pred_region
      %s129 = ssub.s32 %s8, 1
      // Predicated region
      $region13: #{positional_encoding_2d_forward.1} parent=11 // pred_check
        %p130 = pneg %p85
      $region14: #{positional_encoding_2d_forward.1} parent=11 // pred_check_branch
        %132 = sbr.rel (%p130) target = $region16
      $region15: #{positional_encoding_2d_forward.1} parent=11 // pred_region
        %s133 = smul.u32 2, %s19
        %p134 = scmp.lt.s32.totalorder %s18, 0
        %s135 = scalar_select %p134, %s18, 0
        %p136 = scmp.lt.s32.totalorder %s133, 1
        %s137 = scalar_select %p136, %s133, 1
        %s138 = smul.addr %s135, 2
        %s139 = sadd.s32 %s137, %s138
        %s140 = smul.addr %s139, 8
        %s141 = scalar_lea.vmem %s1, %s140
        %s142 = smul.u32 2, %s19
      $region16: #{positional_encoding_2d_forward.1} parent=11 // pred_fallthru
        _
    $region12: #{positional_encoding_2d_forward.1} parent=5 // pred_fallthru
      _
    %p143 = scmp.lt.s32.totalorder %s8, 2
    // Predicated region
    $region17: #{positional_encoding_2d_forward.1} parent=5 // pred_check
      %p144 = pneg %p143
    $region18: #{positional_encoding_2d_forward.1} parent=5 // pred_check_branch
      %146 = sbr.rel (%p144) target = $region20
    $region19: #{positional_encoding_2d_forward.1} parent=5 // pred_region
      // Predicated region
      $region21: #{positional_encoding_2d_forward.1} parent=19 // pred_check
        %p147 = pneg %p51
      $region22: #{positional_encoding_2d_forward.1} parent=19 // pred_check_branch
        %149 = sbr.rel (%p147) target = $region24
      $region23: #{positional_encoding_2d_forward.1} parent=19 // pred_region
        %s150 = smul.u32 2, %s16
        %p151 = scmp.lt.s32.totalorder %s17, 1
        %s152 = scalar_select %p151, %s17, 1
        %p153 = scmp.lt.s32.totalorder %s15, 0
        %s154 = scalar_select %p153, %s15, 0
        %p155 = scmp.lt.s32.totalorder %s150, 1
        %s156 = scalar_select %p155, %s150, 1
        %s157 = smul.addr %s154, 2
        %s158 = sadd.s32 %s156, %s157
        %s159 = smul.addr %s152, 2
        %s160 = sadd.s32 %s158, %s159
        %s161 = smul.addr %s160, 8
        %s162 = scalar_lea.vmem %s0, %s161
        %s163 = smul.u32 2, %s16
      $region24: #{positional_encoding_2d_forward.1} parent=19 // pred_fallthru
        _
    $region20: #{positional_encoding_2d_forward.1} parent=5 // pred_fallthru
      _
    %p164 = scmp.le.s32.totalorder 1, %s8
    %p165 = scmp.lt.s32.totalorder %s8, 3
    %p166 = pnand %p164, %p165
    %p167 = pneg %p166
    // Predicated region
    $region25: #{positional_encoding_2d_forward.1} parent=5 // pred_check
      _
    $region26: #{positional_encoding_2d_forward.1} parent=5 // pred_check_branch
      %169 = sbr.rel (%p166) target = $region28
    $region27: #{positional_encoding_2d_forward.1} parent=5 // pred_region
      %s170 = ssub.s32 %s8, 1
      %s171 = smul.u32 2, %s19
      %p172 = scmp.lt.s32.totalorder %s20, 1
      %s173 = scalar_select %p172, %s20, 1
      %p174 = scmp.lt.s32.totalorder %s18, 0
      %s175 = scalar_select %p174, %s18, 0
      %p176 = scmp.lt.s32.totalorder %s171, 1
      %s177 = scalar_select %p176, %s171, 1
      %s178 = smul.addr %s175, 2
      %s179 = sadd.s32 %s177, %s178
      %s180 = smul.addr %s173, 2
      %s181 = sadd.s32 %s179, %s180
      %s182 = smul.addr %s181, 8
      %s183 = scalar_lea.vmem %s0, %s182
      %p184 = pneg %p57
      %p185 = pneg %p54
      %s186 = smul.u32 2, %s19
      %p187 = scmp.lt.s32.totalorder %s18, 0
      %s188 = scalar_select %p187, %s18, 0
      %p189 = scmp.lt.s32.totalorder %s186, 1
      %s190 = scalar_select %p189, %s186, 1
      %s191 = smul.addr %s188, 2
      %s192 = sadd.s32 %s190, %s191
      %s193 = smul.addr %s192, 8
      %s194 = scalar_lea.vmem %s1, %s193
      %p195 = pneg %p85
      %p196 = pneg %p82
      %p197 = pneg %p115
      %p198 = pneg %p112
      %s199 = smul.u32 2, %s19
      %p200 = scmp.lt.s32.totalorder %s20, 1
      %s201 = scalar_select %p200, %s20, 1
      %p202 = scmp.lt.s32.totalorder %s18, 0
      %s203 = scalar_select %p202, %s18, 0
      %p204 = scmp.lt.s32.totalorder %s199, 1
      %s205 = scalar_select %p204, %s199, 1
      %s206 = smul.addr %s203, 2
      %s207 = sadd.s32 %s205, %s206
      %s208 = smul.addr %s201, 2
      %s209 = sadd.s32 %s207, %s208
      %s210 = smul.addr %s209, 8
      %s211 = scalar_lea.vmem %s2, %s210
      %s212 = smul.u32 2, %s19
      %p213 = scmp.lt.s32.totalorder %s20, 1
      %s214 = scalar_select %p213, %s20, 1
      %p215 = scmp.lt.s32.totalorder %s18, 0
      %s216 = scalar_select %p215, %s18, 0
      %p217 = scmp.lt.s32.totalorder %s212, 1
      %s218 = scalar_select %p217, %s212, 1
      %s219 = smul.addr %s216, 2
      %s220 = sadd.s32 %s218, %s219
      %s221 = smul.addr %s214, 2
      %s222 = sadd.s32 %s220, %s221
      %s223 = smul.addr %s222, 8
      %s224 = scalar_lea.vmem %s0, %s223
      %s225 = smul.u32 2, %s19
      %s226 = smul.u32 2, %s19
      %p227 = scmp.lt.s32.totalorder %s18, 0
      %s228 = scalar_select %p227, %s18, 0
      %p229 = scmp.lt.s32.totalorder %s226, 1
      %s230 = scalar_select %p229, %s226, 1
      %s231 = smul.addr %s228, 2
      %s232 = sadd.s32 %s230, %s231
      %s233 = smul.addr %s232, 8
      %s234 = scalar_lea.vmem %s1, %s233
      %s235 = smul.u32 2, %s19
      %s236 = smul.u32 2, %s19
      %p237 = scmp.lt.s32.totalorder %s20, 1
      %s238 = scalar_select %p237, %s20, 1
      %p239 = scmp.lt.s32.totalorder %s18, 0
      %s240 = scalar_select %p239, %s18, 0
      %p241 = scmp.lt.s32.totalorder %s236, 1
      %s242 = scalar_select %p241, %s236, 1
      %s243 = smul.addr %s240, 2
      %s244 = sadd.s32 %s242, %s243
      %s245 = smul.addr %s238, 2
      %s246 = sadd.s32 %s244, %s245
      %s247 = smul.addr %s246, 8
      %s248 = scalar_lea.vmem %s2, %s247
      %s249 = smul.u32 2, %s19
      %v250 = vld [vmem:[%s224] sm:$0xff]
      %v251 = vld [vmem:[%s224 + $0x8] sm:$0xff]
      %v252 = vld [vmem:[%s234] sm:$0xff]
      %v253 = vld [vmem:[%s234 + $0x8] sm:$0xff]
      %v254 = vadd.f32 %v250, %v252
      %v255 = vadd.f32 %v251, %v253
      %256 = vst [vmem:[%s248] sm:$0xff] %v254
      %257 = vst [vmem:[%s248 + $0x8] sm:$0xff] %v255
      %s258 = smul.u32 2, %s19
      %p259 = scmp.lt.s32.totalorder %s20, 1
      %s260 = scalar_select %p259, %s20, 1
      %p261 = scmp.lt.s32.totalorder %s18, 0
      %s262 = scalar_select %p261, %s18, 0
      %p263 = scmp.lt.s32.totalorder %s258, 1
      %s264 = scalar_select %p263, %s258, 1
      %s265 = smul.addr %s262, 2
      %s266 = sadd.s32 %s264, %s265
      %s267 = smul.addr %s260, 2
      %s268 = sadd.s32 %s266, %s267
      %s269 = smul.addr %s268, 8
      %s270 = scalar_lea.vmem %s2, %s269
      // Predicated region
      $region29: #{positional_encoding_2d_forward.1} parent=27 // pred_check
        %p271 = pneg %p112
      $region30: #{positional_encoding_2d_forward.1} parent=27 // pred_check_branch
        %273 = sbr.rel (%p271) target = $region32
      $region31: #{positional_encoding_2d_forward.1} parent=27 // pred_region
        %s274 = smul.u32 2, %s19
      $region32: #{positional_encoding_2d_forward.1} parent=27 // pred_fallthru
        _
    $region28: #{positional_encoding_2d_forward.1} parent=5 // pred_fallthru
      _
    %p275 = scmp.le.s32.totalorder 2, %s8
    // Predicated region
    $region33: #{positional_encoding_2d_forward.1} parent=5 // pred_check
      %p276 = pneg %p275
    $region34: #{positional_encoding_2d_forward.1} parent=5 // pred_check_branch
      %278 = sbr.rel (%p276) target = $region36
    $region35: #{positional_encoding_2d_forward.1} parent=5 // pred_region
      %s279 = ssub.s32 %s8, 2
      // Predicated region
      $region37: #{positional_encoding_2d_forward.1} parent=35 // pred_check
        %p280 = pneg %p118
      $region38: #{positional_encoding_2d_forward.1} parent=35 // pred_check_branch
        %282 = sbr.rel (%p280) target = $region40
      $region39: #{positional_encoding_2d_forward.1} parent=35 // pred_region
        %s283 = smul.u32 2, %s22
        %p284 = scmp.lt.s32.totalorder %s23, 1
        %s285 = scalar_select %p284, %s23, 1
        %p286 = scmp.lt.s32.totalorder %s21, 0
        %s287 = scalar_select %p286, %s21, 0
        %p288 = scmp.lt.s32.totalorder %s283, 1
        %s289 = scalar_select %p288, %s283, 1
        %s290 = smul.addr %s287, 2
        %s291 = sadd.s32 %s289, %s290
        %s292 = smul.addr %s285, 2
        %s293 = sadd.s32 %s291, %s292
        %s294 = smul.addr %s293, 8
        %s295 = scalar_lea.vmem %s2, %s294
      $region40: #{positional_encoding_2d_forward.1} parent=35 // pred_fallthru
        _
    $region36: #{positional_encoding_2d_forward.1} parent=5 // pred_fallthru
      _
  $region6: #{positional_encoding_2d_forward.1} parent=0 // loop_footer
    %s12 = sadd.s32 1, %s8
  $region7: #{positional_encoding_2d_forward.1} parent=0 // loop_footer_branch
    %7 = sbr.rel target = $region3
  $region8: #{positional_encoding_2d_forward.1} parent=0 // loop_exit
    _

</llo_original>
